<compile_context>
chip_gen: v6e
topology: v6e:2x2x1
jax: 0.10.0
libtpu: 0.0.40
codegen_flags: <defaults>
</compile_context>

<pallas_src>
import functools

import jax
import jax.numpy as jnp
from jax.experimental import pallas as pl
from jax.experimental.pallas import tpu as pltpu


def _ls_ce_partial_kernel(x_ref, tgt_ref, out_ref, *, smoothing: float,
                          n_total: int, block_n: int):
    """Per-tile partial sum of the label-smoothing CE loss.

    x_ref  : (TN, C) logits tile (any float dtype; cast to f32 in-kernel)
    tgt_ref: (TN, 1) int32 class indices tile
    out_ref: (1, 1)  f32 partial sum over the valid rows of this tile
    """
    confidence = 1.0 - smoothing
    i = pl.program_id(0)

    x = x_ref[...].astype(jnp.float32)          # (TN, C) f32
    tgt = tgt_ref[...]                          # (TN, 1) int32
    c = x.shape[-1]

    # Rows past the true batch size (padded tail tile): zero their logits so the
    # math stays finite, and drop them from the partial sum.
    row_ids = i * block_n + jax.lax.broadcasted_iota(jnp.int32, (block_n, 1), 0)
    valid = row_ids < n_total                   # (TN, 1) bool
    x = jnp.where(valid, x, 0.0)

    # Numerically-stable log-softmax pieces WITHOUT building logprobs:
    #   logprob = shifted - lse
    #   nll     = lse - shifted[target]
    #   smooth  = lse - sum(shifted)/C
    m = jnp.max(x, axis=-1, keepdims=True)                              # (TN, 1)
    shifted = x - m                                                     # (TN, C)
    lse = jnp.log(jnp.sum(jnp.exp(shifted), axis=-1, keepdims=True))    # (TN, 1)

    col_ids = jax.lax.broadcasted_iota(jnp.int32, shifted.shape, 1)     # (TN, C)
    onehot = col_ids == tgt                                             # (TN, C)
    gathered = jnp.sum(jnp.where(onehot, shifted, 0.0),
                       axis=-1, keepdims=True)                          # (TN, 1)
    sum_shifted = jnp.sum(shifted, axis=-1, keepdims=True)              # (TN, 1)

    nll = lse - gathered
    smooth = lse - sum_shifted * (1.0 / c)
    per_row = confidence * nll + smoothing * smooth                     # (TN, 1)
    per_row = jnp.where(valid, per_row, 0.0)

    out_ref[...] = jnp.sum(per_row, axis=0, keepdims=True)              # (1, 1)


def _pick_block_n(n: int, c: int, itemsize: int) -> int:
    # ~6 MiB per logits buffer; double-buffered this stays well under the scoped
    # VMEM limit on all of v5e (16 MiB default), v6e (32 MiB) and v7x (64 MiB phys).
    budget = 6 * 1024 * 1024
    tn = budget // max(1, c * itemsize)
    tn = max(16, min(tn, 1024))
    tn = (tn // 16) * 16          # keep sublane-tile friendly for f32 and bf16
    if tn >= n:
        return n                  # full-extent block: no divisibility constraint
    return tn


def label_smoothing_cross_entropy(x: jax.Array, target: jax.Array,
                                  smoothing: float = 0.1, *,
                                  block_n: int | None = None) -> jax.Array:
    """Matches LabelSmoothingCrossEntropy.forward(x, target).

    x:      (N, C) float logits (f32 or bf16; DMA'd as-is, computed in f32)
    target: (N,)   integer class indices
    returns scalar f32 loss
    """
    assert smoothing < 1.0
    n, c = x.shape
    tgt = target.astype(jnp.int32).reshape(n, 1)

    if block_n is None:
        block_n = _pick_block_n(n, c, jnp.dtype(x.dtype).itemsize)
    block_n = min(int(block_n), n)
    if block_n < n:
        block_n = max(16, (block_n // 16) * 16)   # (8,128)/packing constraint
        if block_n >= n:
            block_n = n
    num_tiles = pl.cdiv(n, block_n)

    kernel = functools.partial(_ls_ce_partial_kernel,
                               smoothing=float(smoothing),
                               n_total=n, block_n=block_n)

    partials = pl.pallas_call(
        kernel,
        out_shape=jax.ShapeDtypeStruct((num_tiles, 1), jnp.float32),
        grid=(num_tiles,),
        in_specs=[
            pl.BlockSpec((block_n, c), lambda i: (i, 0)),
            pl.BlockSpec((block_n, 1), lambda i: (i, 0)),
        ],
        out_specs=pl.BlockSpec((1, 1), lambda i: (i, 0)),
        compiler_params=pltpu.CompilerParams(
            # Independent per-tile partial sums -> safe to shard across the two
            # TensorCores on v7x; no-op on single-TC v5e/v6e.
            dimension_semantics=("parallel",),
            vmem_limit_bytes=32 << 20,
        ),
    )(x, tgt)

    # Tiny finalize in XLA: sum per-tile partials, divide by the TRUE batch size.
    return jnp.sum(partials) / n


def _reference(x, target, smoothing=0.1):
    # Pure-JAX reference mirroring the PyTorch module.
    confidence = 1.0 - smoothing
    logprobs = jax.nn.log_softmax(x, axis=-1)
    nll = -jnp.take_along_axis(logprobs, target[:, None], axis=-1)[:, 0]
    smooth = -jnp.mean(logprobs, axis=-1)
    return jnp.mean(confidence * nll + smoothing * smooth)


if __name__ == "__main__":
    k0, k1, k2, k3 = jax.random.split(jax.random.PRNGKey(0), 4)

    # Test 1: small, module-consistent shapes (batch=8 samples, 32 classes), f32.
    N, C = 8, 32
    x = jax.random.normal(k0, (N, C), dtype=jnp.float32)
    target = jax.random.randint(k1, (N,), 0, C, dtype=jnp.int32)

    loss = jax.block_until_ready(
        label_smoothing_cross_entropy(x, target, smoothing=0.1))
    ref = _reference(x, target, smoothing=0.1)
    assert jnp.allclose(loss, ref, atol=1e-5, rtol=1e-5), (loss, ref)

    # Test 2: exercise the tiled path with a padded tail tile and bf16 logits.
    N2, C2 = 300, 512
    x2 = jax.random.normal(k2, (N2, C2), dtype=jnp.float32).astype(jnp.bfloat16)
    t2 = jax.random.randint(k3, (N2,), 0, C2, dtype=jnp.int32)

    loss2 = jax.block_until_ready(
        label_smoothing_cross_entropy(x2, t2, smoothing=0.1, block_n=128))
    ref2 = _reference(x2.astype(jnp.float32), t2, smoothing=0.1)
    assert jnp.allclose(loss2, ref2, atol=1e-4, rtol=1e-4), (loss2, ref2)

    print("KERNEL_OK")
</pallas_src>

<mosaic_0001>
module attributes {stable_mosaic.version = 11 : i64} {
  func.func @_ls_ce_partial_kernel(%arg0: i32, %arg1: memref<8x32xf32, #tpu.memory_space<vmem>>, %arg2: memref<8x1xi32, #tpu.memory_space<vmem>>, %arg3: memref<1x1xf32, #tpu.memory_space<vmem>>) attributes {dimension_semantics = [#tpu.dimension_semantics<parallel>], iteration_bounds = array<i64: 1>, scalar_prefetch = 0 : i64, scratch_operands = 0 : i64, tpu.core_type = #tpu.core_type<tc>, window_params = [{transform_indices = @transform_0, window_bounds = array<i64: 8, 32>}, {transform_indices = @transform_1, window_bounds = array<i64: 8, 1>}, {transform_indices = @transform_2, window_bounds = array<i64: 1, 1>}]} {
    %c0 = arith.constant 0 : index
    %c0_0 = arith.constant 0 : index
    %0 = vector.load %arg1[%c0, %c0_0] : memref<8x32xf32, #tpu.memory_space<vmem>>, vector<8x32xf32>
    %c0_1 = arith.constant 0 : index
    %c0_2 = arith.constant 0 : index
    %1 = vector.load %arg2[%c0_1, %c0_2] : memref<8x1xi32, #tpu.memory_space<vmem>>, vector<8x1xi32>
    %c8_i32 = arith.constant 8 : i32
    %2 = arith.muli %arg0, %c8_i32 : i32
    %3 = tpu.iota {dimensions = array<i32: 0>} : vector<8x1xi32>
    %4 = vector.broadcast %2 : i32 to vector<8x1xi32>
    %5 = arith.addi %4, %3 : vector<8x1xi32>
    %c8_i32_3 = arith.constant 8 : i32
    %6 = vector.broadcast %c8_i32_3 : i32 to vector<8x1xi32>
    %7 = arith.cmpi slt, %5, %6 : vector<8x1xi32>
    %cst = arith.constant 0.000000e+00 : f32
    %8 = vector.shape_cast %7 : vector<8x1xi1> to vector<8x1xi1>
    %9 = vector.broadcast %8 : vector<8x1xi1> to vector<8x32xi1>
    %10 = vector.broadcast %cst : f32 to vector<8x32xf32>
    %11 = arith.select %9, %0, %10 : vector<8x32xi1>, vector<8x32xf32>
    %cst_4 = arith.constant dense<0xFF800000> : vector<8xf32>
    %12 = vector.multi_reduction <maximumf>, %11, %cst_4 [1] : vector<8x32xf32> to vector<8xf32>
    %13 = vector.shape_cast %12 : vector<8xf32> to vector<8x1xf32>
    %14 = vector.broadcast %13 : vector<8x1xf32> to vector<8x32xf32>
    %15 = arith.subf %11, %14 : vector<8x32xf32>
    %16 = math.exp %15 : vector<8x32xf32>
    %cst_5 = arith.constant dense<0.000000e+00> : vector<8xf32>
    %17 = vector.multi_reduction <add>, %16, %cst_5 [1] : vector<8x32xf32> to vector<8xf32>
    %18 = vector.shape_cast %17 : vector<8xf32> to vector<8x1xf32>
    %19 = math.log %18 : vector<8x1xf32>
    %20 = tpu.iota {dimensions = array<i32: 1>} : vector<8x32xi32>
    %21 = vector.broadcast %1 : vector<8x1xi32> to vector<8x32xi32>
    %22 = arith.cmpi eq, %20, %21 : vector<8x32xi32>
    %cst_6 = arith.constant 0.000000e+00 : f32
    %23 = vector.broadcast %cst_6 : f32 to vector<8x32xf32>
    %24 = arith.select %22, %15, %23 : vector<8x32xi1>, vector<8x32xf32>
    %cst_7 = arith.constant dense<0.000000e+00> : vector<8xf32>
    %25 = vector.multi_reduction <add>, %24, %cst_7 [1] : vector<8x32xf32> to vector<8xf32>
    %26 = vector.shape_cast %25 : vector<8xf32> to vector<8x1xf32>
    %cst_8 = arith.constant dense<0.000000e+00> : vector<8xf32>
    %27 = vector.multi_reduction <add>, %15, %cst_8 [1] : vector<8x32xf32> to vector<8xf32>
    %28 = vector.shape_cast %27 : vector<8xf32> to vector<8x1xf32>
    %29 = arith.subf %19, %26 : vector<8x1xf32>
    %cst_9 = arith.constant 3.125000e-02 : f32
    %30 = vector.broadcast %cst_9 : f32 to vector<8x1xf32>
    %31 = arith.mulf %28, %30 : vector<8x1xf32>
    %32 = arith.subf %19, %31 : vector<8x1xf32>
    %cst_10 = arith.constant 0.899999976 : f32
    %33 = vector.broadcast %cst_10 : f32 to vector<8x1xf32>
    %34 = arith.mulf %33, %29 : vector<8x1xf32>
    %cst_11 = arith.constant 1.000000e-01 : f32
    %35 = vector.broadcast %cst_11 : f32 to vector<8x1xf32>
    %36 = arith.mulf %35, %32 : vector<8x1xf32>
    %37 = arith.addf %34, %36 : vector<8x1xf32>
    %cst_12 = arith.constant 0.000000e+00 : f32
    %38 = vector.broadcast %cst_12 : f32 to vector<8x1xf32>
    %39 = arith.select %7, %37, %38 : vector<8x1xi1>, vector<8x1xf32>
    %cst_13 = arith.constant dense<0.000000e+00> : vector<1xf32>
    %40 = vector.multi_reduction <add>, %39, %cst_13 [0] : vector<8x1xf32> to vector<1xf32>
    %41 = vector.shape_cast %40 : vector<1xf32> to vector<1x1xf32>
    %c0_14 = arith.constant 0 : index
    %c0_15 = arith.constant 0 : index
    %42 = vector.load %arg3[%c0_14, %c0_15] : memref<1x1xf32, #tpu.memory_space<vmem>>, vector<1x1xf32>
    tpu.vector_store %arg3[%c0_14, %c0_15], %41 {strides = array<i32>} : memref<1x1xf32, #tpu.memory_space<vmem>>, vector<1x1xf32>,
    return
  }
  func.func @transform_0(%arg0: i32) -> (i32, i32) {
    %c0_i32 = arith.constant 0 : i32
    %c0_i32_0 = arith.constant 0 : i32
    return %arg0, %c0_i32 : i32, i32
  }
  func.func @transform_1(%arg0: i32) -> (i32, i32) {
    %c0_i32 = arith.constant 0 : i32
    %c0_i32_0 = arith.constant 0 : i32
    return %arg0, %c0_i32 : i32, i32
  }
  func.func @transform_2(%arg0: i32) -> (i32, i32) {
    %c0_i32 = arith.constant 0 : i32
    %c0_i32_0 = arith.constant 0 : i32
    return %arg0, %c0_i32 : i32, i32
  }
}

</mosaic_0001>

<llo_original>
// kernel: tpu_custom_call.1
$region0: #{tpu_custom_call.1}
  #allocation0 [shape = 'u32[]', space=smem, size = 0x4, offset = 0x4, fixed_abs, tag = 'smem constant byte address 0x4 - core index']
  #allocation1 [shape = 'u32[144,128]{1,0:T(1,128)}', space=vmem, size = 0x12000, scoped, tag = 'internal scratch']
  %s0 = inlined_call_operand.vmem [shape: f32[8,32], index: 0, kind: input, shape index: {}]
  %s1 = inlined_call_operand.vmem [shape: s32[8,1], index: 1, kind: input, shape index: {}]
  %s2 = inlined_call_operand.hbm [shape: f32[1,1], index: 2, kind: output, shape index: {}]
  %s3 = sld [smem:[#allocation0]]
  $region18: #{tpu_custom_call.1} parent=0
    _
  %s5 = ssub.s32 1, %s3
  %s6 = scalar_select 0, %s5, %s3
  $region1: #{tpu_custom_call.1} parent=0
    #allocation2 [shape = 'u8[512]{0}', space=vmem, size = 0x400, scoped, tag = 'output window, operand 0, single buffered']
    #allocation3 [shape = 's32[1]{0}', space=sflag, size = 0x4, scoped, tag = 'scoped memory for tpu_custom_call.1']
    %7 = vsyncpa [#allocation3], 0
    // Predicated region
    $region2: #{tpu_custom_call.1} parent=1 // pred_check
      _
    $region3: #{tpu_custom_call.1} parent=1 // pred_check_branch
      %9 = sbr.rel (0) target = $region5
    $region4: #{tpu_custom_call.1} parent=1 // pred_region
      _
    $region5: #{tpu_custom_call.1} parent=1 // pred_fallthru
      _
    // Predicated region
    $region6: #{tpu_custom_call.1} parent=1 // pred_check
      _
    $region7: #{tpu_custom_call.1} parent=1 // pred_check_branch
      %11 = sbr.rel (0) target = $region9
    $region8: #{tpu_custom_call.1} parent=1 // pred_region
      _
    $region9: #{tpu_custom_call.1} parent=1 // pred_fallthru
      _
    %v12 = vld [vmem:[%s0] sm:$0xff]
    %v13 = vld [vmem:[%s1] sm:$0xff]
    %s14 = smul.u32 0, 8
    %v15 = vlaneseq
    %v16 = vshrl.u32 %v15, 7
    %v17 = vstv %s14
    %v18 = vadd.s32 %v17, %v16
    %vm19 = vcmp.lt.s32.totalorder %v18, 8
    %v20 = vsel %vm19, 1, 0
    %vm21 = vcmp.eq.s32.totalorder %v20, 1
    %v22 = vsel %vm21, %v12, 0.0
    %vm23 = vcmask 261120
    %v24 = vsel %vm23, %v22, -inf
    %25 = vmax.xlane.f32.xlu0 %v24
    %v26 = vpop.xlane.xlu0 %25
    %v27 = vsub.f32 %v22, %v26
    %v28 = vmul.f32 %v27, 1.442695
    %v29 = vpow.pop %v28
    %v30 = vsel %vm23, %v29, 0.0
    %31 = vadd.xlane.f32.xlu0 %v30
    %v32 = vpop.xlane.xlu0 %31
    %v33 = vlog2.pop %v32
    %v34 = vmul.f32 %v33, 0.6931472
    %v35 = vlaneseq
    %v36 = vand.u32 %v35, 127
    %37 = vset.pattern.permute.xlu0 0
    %38 = vperm.xlu0 %37, %v13
    %v39 = vpop.permute.xlu0 %38
    %vm40 = vcmp.eq.s32.totalorder %v36, %v39
    %v41 = vsel %vm40, %v27, 0.0
    %v42 = vsel %vm23, %v41, 0.0
    %43 = vadd.xlane.f32.xlu0 %v42
    %v44 = vpop.xlane.xlu0 %43
    %v45 = vsel %vm23, %v27, 0.0
    %46 = vadd.xlane.f32.xlu0 %v45
    %v47 = vpop.xlane.xlu0 %46
    %v48 = vsub.f32 %v34, %v44
    %v49 = vmul.f32 %v47, 0.03125
    %v50 = vsub.f32 %v34, %v49
    %v51 = vmul.f32 %v48, 0.9
    %v52 = vmul.f32 %v50, 0.1
    %v53 = vadd.f32 %v51, %v52
    %v54 = vsel %vm19, %v53, 0.0
    %v55 = vrot.slane %v54, 4
    %v56 = vadd.f32 %v54, %v55
    %v57 = vrot.slane %v56, 2
    %v58 = vadd.f32 %v56, %v57
    %v59 = vrot.slane %v58, 1
    %v60 = vadd.f32 %v58, %v59
    %vm61 = vcmask 0
    %62 = vst.msk [vmem:[#allocation2] sm:$0x1] %vm61, %v60
    // Predicated region
    $region10: #{tpu_custom_call.1} parent=1 // pred_check
      _
    $region11: #{tpu_custom_call.1} parent=1 // pred_check_branch
      %64 = sbr.rel (0) target = $region13
    $region12: #{tpu_custom_call.1} parent=1 // pred_region
      %s66 = ssub.s32 16, 16
      %67 = vsyncadd [#allocation3], %s66
      %s69 = sshll.u32 [#allocation2], 4
      %s70 = int_to_ptr.vmem [resolvable:$true] %s69
      %72 = dma.vmem_to_hbm [thread:$0]  %s70, 16, %s2, [#allocation3]
    $region13: #{tpu_custom_call.1} parent=1 // pred_fallthru
      _
    // Predicated region
    $region14: #{tpu_custom_call.1} parent=1 // pred_check
      _
    $region15: #{tpu_custom_call.1} parent=1 // pred_check_branch
      %74 = sbr.rel (0) target = $region17
    $region16: #{tpu_custom_call.1} parent=1 // pred_region
      %75 = dma.done [#allocation3], 16
    $region17: #{tpu_custom_call.1} parent=1 // pred_fallthru
      _
    %76 = vsyncpa [#allocation3], 1

</llo_original>
